<compile_context>
chip_gen: v6e
topology: v6e:2x2x1
jax: 0.10.0
libtpu: 0.0.40
codegen_flags: <defaults>
</compile_context>

<pallas_src>
import jax
import jax.numpy as jnp
from jax.experimental import pallas as pl
from jax.experimental.pallas import tpu as pltpu

B, S, H = 1, 384, 768
NH, HD = 12, 64

# Lane/sublane density guards (keeps the HBM layout tile-aligned for f32/bf16).
assert H % 128 == 0, "last dim must stay a multiple of 128 lanes"
assert S % 16 == 0, "second-to-last dim must stay a multiple of 16 sublanes (bf16-safe)"
assert NH * HD == H


def _dma_copy_kernel(x_hbm, o_hbm, sem):
    # Single direct HBM -> HBM DMA of the whole (B, S, H) tensor.
    # No VMEM staging, no vector copy loop.
    cp = pltpu.make_async_copy(x_hbm, o_hbm, sem)
    cp.start()
    cp.wait()


def view_as_heads_pallas(x30):
    """Pallas path: one HBM->HBM DMA; the head split is a free reshape outside."""
    assert x30.shape == (B, S, H)
    flat = pl.pallas_call(
        _dma_copy_kernel,
        out_shape=jax.ShapeDtypeStruct((B, S, H), x30.dtype),
        # Raw HBM refs on both sides: no automatic HBM<->VMEM pipelining.
        in_specs=[pl.BlockSpec(memory_space=pl.ANY)],
        out_specs=pl.BlockSpec(memory_space=pl.ANY),
        scratch_shapes=[pltpu.SemaphoreType.DMA(())],
    )(x30)
    # Metadata-only reshape outside the kernel (keeps the DMA flat / dense).
    return flat.reshape(B, S, NH, HD)


def view_as_heads(x30, x35):
    """Default path: the .view is a pure metadata reshape -> no kernel at all."""
    return jnp.reshape(x30, x35)


class M:
    """Mirrors the PyTorch module's forward semantics."""

    def forward(self, x34, x30, use_pallas=False):
        x35 = tuple(x34) + (NH, HD)          # operator.add on tuples
        if use_pallas:
            x36 = view_as_heads_pallas(x30)  # single HBM->HBM DMA + free reshape
        else:
            x36 = view_as_heads(x30, x35)    # recommended: pure reshape
        assert x36.shape == x35
        return x36


if __name__ == "__main__":
    key = jax.random.PRNGKey(0)
    # x30 ~ torch.randn([1, 384, 768])
    x30 = jax.random.normal(key, (B, S, H), dtype=jnp.float32)
    x34 = (1, 384)

    m = M()

    # Reference semantics (PyTorch .view on a contiguous tensor == reshape).
    ref = x30.reshape(B, S, NH, HD)

    # Default (recommended) path: pure reshape, no kernel launch.
    out = m.forward(x34, x30)
    out = jax.block_until_ready(out)

    # Pallas path: run the DMA kernel once and verify it too.
    out_pallas = m.forward(x34, x30, use_pallas=True)
    out_pallas = jax.block_until_ready(out_pallas)

    assert out.shape == (1, 384, 12, 64)
    assert out.dtype == jnp.float32
    assert bool(jnp.array_equal(out, ref))
    assert out_pallas.shape == (1, 384, 12, 64)
    assert out_pallas.dtype == jnp.float32
    assert bool(jnp.array_equal(out_pallas, ref))

    print("KERNEL_OK")
</pallas_src>

<mosaic_0001>
module attributes {stable_mosaic.version = 11 : i64} {
  func.func @_dma_copy_kernel(%arg0: memref<1x384x768xf32, #tpu.memory_space<any>>, %arg1: memref<1x384x768xf32, #tpu.memory_space<any>>, %arg2: memref<!tpu.dma_semaphore, #tpu.memory_space<semaphore_mem>>) attributes {dimension_semantics = [], scalar_prefetch = 0 : i64, scratch_operands = 1 : i64, tpu.core_type = #tpu.core_type<tc>} {
    tpu.enqueue_dma source(%arg0 : memref<1x384x768xf32, #tpu.memory_space<any>>) target(%arg1 : memref<1x384x768xf32, #tpu.memory_space<any>>) target_semaphore(%arg2 : memref<!tpu.dma_semaphore, #tpu.memory_space<semaphore_mem>>)
    tpu.wait_dma2 semaphore(%arg2 : memref<!tpu.dma_semaphore, #tpu.memory_space<semaphore_mem>>) src(%arg0 : memref<1x384x768xf32, #tpu.memory_space<any>>) dst(%arg1 : memref<1x384x768xf32, #tpu.memory_space<any>>)
    return
  }
}

</mosaic_0001>

<llo_original>
// kernel: tpu_custom_call.1
$region0: #{tpu_custom_call.1}
  #allocation0 [shape = 'u32[]', space=smem, size = 0x4, offset = 0x4, fixed_abs, tag = 'smem constant byte address 0x4 - core index']
  #allocation1 [shape = 'u32[144,128]{1,0:T(1,128)}', space=vmem, size = 0x12000, scoped, tag = 'internal scratch']
  #allocation2 [shape = 's32[1]{0}', space=sflag, size = 0x4, scoped, tag = 'scratch operand']
  #allocation3 [shape = 's32[]', space=sflag, size = 0x4, offset = 0, fixed_abs, tag = 'sflag constant byte address 0x0 - dummy sync flag']
  #allocation4 [shape = 'u32[0]{0}', space=smem, size = 0, offset = 0, fixed_abs, tag = 'smem constant byte address 0x0 - null']
  %s0 = inlined_call_operand.hbm [shape: f32[1,384,768], index: 0, kind: input, shape index: {}]
  %s1 = inlined_call_operand.hbm [shape: f32[1,384,768], index: 1, kind: output, shape index: {}]
  %s2 = sld [smem:[#allocation0]]
  $region2: #{tpu_custom_call.1} parent=0
    _
  %s4 = ssub.s32 1, %s2
  %s5 = scalar_select 0, %s4, %s2
  %s7 = sshll.u32 1, 14
  %s8 = sxor.u32 4294967295, %s7
  %12 = dma.general %s0, 36864, %s1, [#allocation2], 131072, [#allocation4], 0, 0
  %s13 = smul.u32 8, 1
  %s14 = smul.u32 %s13, 48
  %s15 = smul.u32 %s14, 6
  %s16 = sshll.u32 %s15, 4
  %17 = dma.done [#allocation2], %s16
  %18 = vsyncmov [#allocation2]
  %s19 = vpop.sfrf %18
  %p20 = scmp.eq.s32.totalorder %s19, 0
  %p21 = pneg %p20
  %23 = shalt.err (%p21)

</llo_original>
